<compile_context>
chip_gen: v7x
topology: tpu7x:2x2x1
jax: 0.10.0
libtpu: 0.0.40
codegen_flags: <defaults>
</compile_context>

<pallas_src>
import jax
import jax.numpy as jnp
from jax.experimental import pallas as pl
from jax.experimental.pallas import tpu as pltpu

_K = 8          # Conv2d kernel width of embed_layer
_EPS = 1e-5     # BatchNorm / LayerNorm eps


def _gelu(x):
    # tanh-approximate GELU (see TODO above).
    c = 0.7978845608028654  # sqrt(2/pi)
    return 0.5 * x * (1.0 + jnp.tanh(c * (x + 0.044715 * x * x * x)))


def _layernorm(x, gamma, beta):
    mu = jnp.mean(x, axis=-1, keepdims=True)
    xc = x - mu
    var = jnp.mean(xc * xc, axis=-1, keepdims=True)
    return xc * jax.lax.rsqrt(var + _EPS) * gamma + beta


def _convtran_kernel(xp_ref,
                     w1_ref, b1_ref, w2_ref, b2_ref,
                     wv_ref, gto_ref, bto_ref,
                     g1_ref, be1_ref,
                     wf1_ref, bf1_ref, wf2_ref, bf2_ref,
                     g2_ref, be2_ref,
                     wco_ref, bco_ref,
                     rep_ref, logit_ref):
    f32 = jnp.float32
    x = xp_ref[...].astype(f32)                              # (TB, K)

    # embed_layer: Conv2d(1, emb, [1,8], stride=2) as im2col matmul, BN folded.
    e1 = _gelu(jnp.dot(x, w1_ref[...], preferred_element_type=f32)
               + b1_ref[...])                                # (TB, emb)

    # embed_layer2: 1x1 Conv2d(emb, emb) as matmul, BN folded.
    xs = _gelu(jnp.dot(e1, w2_ref[...], preferred_element_type=f32)
               + b2_ref[...])                                # (TB, emb) == x_src

    # Attention over a length-1 sequence: softmax over a single key == 1, so
    # the attention output is exactly the value projection; to_out LayerNorm
    # is applied as in ConvTran's Attention module.
    v = jnp.dot(xs, wv_ref[...], preferred_element_type=f32)
    attn_out = _layernorm(v, gto_ref[...], bto_ref[...])

    # Residual + LayerNorm.
    att = _layernorm(xs + attn_out, g1_ref[...], be1_ref[...])

    # FeedForward: Linear -> ReLU -> (Dropout=id) -> Linear -> (Dropout=id).
    h = jnp.maximum(
        jnp.dot(att, wf1_ref[...], preferred_element_type=f32) + bf1_ref[...],
        0.0)
    ff = jnp.dot(h, wf2_ref[...], preferred_element_type=f32) + bf2_ref[...]

    # Residual + LayerNorm2.  With T == 1, permute+flatten is the identity in
    # this (batch, feature) layout, so `out` IS Representation_out.
    out = _layernorm(att + ff, g2_ref[...], be2_ref[...])

    rep_ref[...] = out
    logit_ref[...] = (jnp.dot(out, wco_ref[...], preferred_element_type=f32)
                      + bco_ref[...])


def new_conv_tran_forward(x, params, *, num_heads):
    """x: (B, C, L) in the PyTorch convention.  Returns (rep, logits)."""
    B, C, L = x.shape
    assert C == 1, "NewConvTran.forward is only shape-consistent for C == 1"
    T = (L - _K) // 2 + 1
    assert T == 1, "flatten + Linear(emb_size, nc) requires conv output len 1"
    emb = params['conv1_w'].shape[0]
    assert emb % num_heads == 0
    nc = params['co_w'].shape[0]

    # ---- host-side weight preparation (BN folding, (in, out) layouts) ----
    def bn_fold(w_io, b_o, bn):
        g, be, m, v = bn
        s = g / jnp.sqrt(v + _EPS)
        return w_io * s[None, :], ((b_o - m) * s + be)[None, :]

    w1 = params['conv1_w'].reshape(emb, _K).T                 # (K, emb)
    w1f, b1f = bn_fold(w1, params['conv1_b'], params['bn1'])
    w2 = params['conv2_w'].reshape(emb, emb).T                # (emb_in, emb_out)
    w2f, b2f = bn_fold(w2, params['conv2_b'], params['bn2'])

    wv = params['wv'].T                                       # (emb, emb)
    gto = params['ln_to'][0][None, :]
    bto = params['ln_to'][1][None, :]
    g1 = params['ln1'][0][None, :]
    be1 = params['ln1'][1][None, :]
    wf1 = params['ff1_w'].T                                   # (emb, dim_ff)
    bf1 = params['ff1_b'][None, :]
    wf2 = params['ff2_w'].T                                   # (dim_ff, emb)
    bf2 = params['ff2_b'][None, :]
    g2 = params['ln2'][0][None, :]
    be2 = params['ln2'][1][None, :]
    wco = params['co_w'].T                                    # (emb, nc)
    bco = params['co_b'][None, :]

    # im2col patches: with C == 1, kernel [1,8], stride 2 and a single output
    # position, the patch is simply the first K samples of each series.
    xp = x[:, 0, :_K].astype(jnp.float32)                     # (B, K)

    # Batch tiling: whole batch per step when small, 128-row tiles otherwise.
    TB = 128 if B >= 128 else ((B + 7) // 8) * 8
    nb = -(-B // TB)
    B_pad = nb * TB
    if B_pad != B:
        xp = jnp.pad(xp, ((0, B_pad - B), (0, 0)))

    def full(a):
        nd = a.ndim
        return pl.BlockSpec(a.shape, lambda i, _nd=nd: (0,) * _nd)

    grid_spec = pltpu.PrefetchScalarGridSpec(
        num_scalar_prefetch=0,
        grid=(nb,),
        in_specs=[
            pl.BlockSpec((TB, _K), lambda i: (i, 0)),
            full(w1f), full(b1f), full(w2f), full(b2f),
            full(wv), full(gto), full(bto),
            full(g1), full(be1),
            full(wf1), full(bf1), full(wf2), full(bf2),
            full(g2), full(be2),
            full(wco), full(bco),
        ],
        out_specs=[
            pl.BlockSpec((TB, emb), lambda i: (i, 0)),
            pl.BlockSpec((TB, nc), lambda i: (i, 0)),
        ],
    )

    rep_pad, logit_pad = pl.pallas_call(
        _convtran_kernel,
        out_shape=(jax.ShapeDtypeStruct((B_pad, emb), jnp.float32),
                   jax.ShapeDtypeStruct((B_pad, nc), jnp.float32)),
        grid_spec=grid_spec,
        compiler_params=pltpu.CompilerParams(
            dimension_semantics=("parallel",)),
    )(xp, w1f, b1f, w2f, b2f, wv, gto, bto, g1, be1,
      wf1, bf1, wf2, bf2, g2, be2, wco, bco)

    return rep_pad[:B], logit_pad[:B]


def init_params(key, channel_size, emb_size, num_heads, dim_ff, num_classes):
    ks = jax.random.split(key, 20)

    def lin(k, out_d, in_d):
        return 0.1 * jax.random.normal(k, (out_d, in_d), jnp.float32)

    def bn(k, n):
        k1, k2, k3, k4 = jax.random.split(k, 4)
        return (jax.random.uniform(k1, (n,), jnp.float32, 0.5, 1.5),
                0.1 * jax.random.normal(k2, (n,), jnp.float32),
                0.1 * jax.random.normal(k3, (n,), jnp.float32),
                jax.random.uniform(k4, (n,), jnp.float32, 0.5, 1.5))

    def ln(k, n):
        k1, k2 = jax.random.split(k)
        return (1.0 + 0.1 * jax.random.normal(k1, (n,), jnp.float32),
                0.1 * jax.random.normal(k2, (n,), jnp.float32))

    return {
        'conv1_w': 0.2 * jax.random.normal(ks[0], (emb_size, 1, 1, _K), jnp.float32),
        'conv1_b': 0.1 * jax.random.normal(ks[1], (emb_size,), jnp.float32),
        'bn1': bn(ks[2], emb_size),
        'conv2_w': 0.2 * jax.random.normal(
            ks[3], (emb_size, emb_size, channel_size, 1), jnp.float32),
        'conv2_b': 0.1 * jax.random.normal(ks[4], (emb_size,), jnp.float32),
        'bn2': bn(ks[5], emb_size),
        'wq': lin(ks[6], emb_size, emb_size),     # inert for T == 1
        'wk': lin(ks[7], emb_size, emb_size),     # inert for T == 1
        'wv': lin(ks[8], emb_size, emb_size),
        'ln_to': ln(ks[9], emb_size),
        'ln1': ln(ks[10], emb_size),
        'ff1_w': lin(ks[11], dim_ff, emb_size),
        'ff1_b': 0.1 * jax.random.normal(ks[12], (dim_ff,), jnp.float32),
        'ff2_w': lin(ks[13], emb_size, dim_ff),
        'ff2_b': 0.1 * jax.random.normal(ks[14], (emb_size,), jnp.float32),
        'ln2': ln(ks[15], emb_size),
        'co_w': lin(ks[16], num_classes, emb_size),
        'co_b': 0.1 * jax.random.normal(ks[17], (num_classes,), jnp.float32),
    }


def new_conv_tran_reference(x, params, num_heads):
    """Pure-JAX mirror of the PyTorch forward (eval semantics, full MHA)."""
    f32 = jnp.float32
    x4 = x[:, None, :, :].astype(f32)                         # (B,1,C,L)

    def bn2d(y, bn):
        g, b, m, v = bn
        s = (g / jnp.sqrt(v + _EPS))[None, :, None, None]
        return (y - m[None, :, None, None]) * s + b[None, :, None, None]

    y = jax.lax.conv_general_dilated(
        x4, params['conv1_w'], window_strides=(2, 2), padding='VALID',
        dimension_numbers=('NCHW', 'OIHW', 'NCHW'))
    y = _gelu(bn2d(y + params['conv1_b'][None, :, None, None], params['bn1']))

    y = jax.lax.conv_general_dilated(
        y, params['conv2_w'], window_strides=(1, 1), padding='VALID',
        dimension_numbers=('NCHW', 'OIHW', 'NCHW'))
    y = _gelu(bn2d(y + params['conv2_b'][None, :, None, None], params['bn2']))

    y = y[:, :, 0, :]                                          # squeeze(2)
    xs = jnp.transpose(y, (0, 2, 1))                           # (B, T, emb)

    B, T, E = xs.shape
    H, d = num_heads, E // num_heads
    scale = E ** -0.5
    q = xs @ params['wq'].T
    k = xs @ params['wk'].T
    v = xs @ params['wv'].T
    qh = q.reshape(B, T, H, d).transpose(0, 2, 1, 3)
    kh = k.reshape(B, T, H, d).transpose(0, 2, 1, 3)
    vh = v.reshape(B, T, H, d).transpose(0, 2, 1, 3)
    attn = jax.nn.softmax(jnp.einsum('bhtd,bhsd->bhts', qh, kh) * scale, -1)
    o = jnp.einsum('bhts,bhsd->bhtd', attn, vh)
    o = o.transpose(0, 2, 1, 3).reshape(B, T, E)

    def lnorm(z, gb):
        g, b = gb
        mu = jnp.mean(z, -1, keepdims=True)
        var = jnp.mean((z - mu) ** 2, -1, keepdims=True)
        return (z - mu) * jax.lax.rsqrt(var + _EPS) * g + b

    o = lnorm(o, params['ln_to'])                              # Attention.to_out
    att = lnorm(xs + o, params['ln1'])
    h = jax.nn.relu(att @ params['ff1_w'].T + params['ff1_b'])
    ff = h @ params['ff2_w'].T + params['ff2_b']
    out = lnorm(att + ff, params['ln2'])
    rep = jnp.transpose(out, (0, 2, 1)).reshape(B, -1)         # (B, emb*T)
    logits = rep @ params['co_w'].T + params['co_b']
    return rep, logits


if __name__ == "__main__":
    # NewConvTran's forward is only shape-consistent for C == 1 and a conv
    # output length of 1 (seq_len 8 or 9): see module analysis at the top.
    B, C, L = 8, 1, 8
    emb_size, num_heads, dim_ff, num_classes = 32, 4, 64, 6

    key = jax.random.PRNGKey(0)
    kx, kp = jax.random.split(key)
    x = jax.random.normal(kx, (B, C, L), jnp.float32)          # PyTorch NCW input
    params = init_params(kp, C, emb_size, num_heads, dim_ff, num_classes)

    rep, logits = new_conv_tran_forward(x, params, num_heads=num_heads)
    jax.block_until_ready((rep, logits))

    rep_ref, logits_ref = new_conv_tran_reference(x, params, num_heads)
    assert rep.shape == (B, emb_size) and logits.shape == (B, num_classes)
    assert jnp.allclose(rep, rep_ref, atol=1e-4, rtol=1e-4)
    assert jnp.allclose(logits, logits_ref, atol=1e-4, rtol=1e-4)
    print("KERNEL_OK")
</pallas_src>

<mosaic_0001>
module attributes {stable_mosaic.version = 11 : i64} {
  func.func @_convtran_kernel(%arg0: i32, %arg1: memref<8x8xf32, #tpu.memory_space<vmem>>, %arg2: memref<8x32xf32, #tpu.memory_space<vmem>>, %arg3: memref<1x32xf32, #tpu.memory_space<vmem>>, %arg4: memref<32x32xf32, #tpu.memory_space<vmem>>, %arg5: memref<1x32xf32, #tpu.memory_space<vmem>>, %arg6: memref<32x32xf32, #tpu.memory_space<vmem>>, %arg7: memref<1x32xf32, #tpu.memory_space<vmem>>, %arg8: memref<1x32xf32, #tpu.memory_space<vmem>>, %arg9: memref<1x32xf32, #tpu.memory_space<vmem>>, %arg10: memref<1x32xf32, #tpu.memory_space<vmem>>, %arg11: memref<32x64xf32, #tpu.memory_space<vmem>>, %arg12: memref<1x64xf32, #tpu.memory_space<vmem>>, %arg13: memref<64x32xf32, #tpu.memory_space<vmem>>, %arg14: memref<1x32xf32, #tpu.memory_space<vmem>>, %arg15: memref<1x32xf32, #tpu.memory_space<vmem>>, %arg16: memref<1x32xf32, #tpu.memory_space<vmem>>, %arg17: memref<32x6xf32, #tpu.memory_space<vmem>>, %arg18: memref<1x6xf32, #tpu.memory_space<vmem>>, %arg19: memref<8x32xf32, #tpu.memory_space<vmem>>, %arg20: memref<8x6xf32, #tpu.memory_space<vmem>>) attributes {dimension_semantics = [#tpu.dimension_semantics<parallel>], iteration_bounds = array<i64: 1>, scalar_prefetch = 0 : i64, scratch_operands = 0 : i64, tpu.core_type = #tpu.core_type<tc>, window_params = [{transform_indices = @transform_0, window_bounds = array<i64: 8, 8>}, {pipeline_mode = #tpu.pipeline_mode<synchronous>, transform_indices = @transform_1, window_bounds = array<i64: 8, 32>}, {pipeline_mode = #tpu.pipeline_mode<synchronous>, transform_indices = @transform_2, window_bounds = array<i64: 1, 32>}, {pipeline_mode = #tpu.pipeline_mode<synchronous>, transform_indices = @transform_3, window_bounds = array<i64: 32, 32>}, {pipeline_mode = #tpu.pipeline_mode<synchronous>, transform_indices = @transform_4, window_bounds = array<i64: 1, 32>}, {pipeline_mode = #tpu.pipeline_mode<synchronous>, transform_indices = @transform_5, window_bounds = array<i64: 32, 32>}, {pipeline_mode = #tpu.pipeline_mode<synchronous>, transform_indices = @transform_6, window_bounds = array<i64: 1, 32>}, {pipeline_mode = #tpu.pipeline_mode<synchronous>, transform_indices = @transform_7, window_bounds = array<i64: 1, 32>}, {pipeline_mode = #tpu.pipeline_mode<synchronous>, transform_indices = @transform_8, window_bounds = array<i64: 1, 32>}, {pipeline_mode = #tpu.pipeline_mode<synchronous>, transform_indices = @transform_9, window_bounds = array<i64: 1, 32>}, {pipeline_mode = #tpu.pipeline_mode<synchronous>, transform_indices = @transform_10, window_bounds = array<i64: 32, 64>}, {pipeline_mode = #tpu.pipeline_mode<synchronous>, transform_indices = @transform_11, window_bounds = array<i64: 1, 64>}, {pipeline_mode = #tpu.pipeline_mode<synchronous>, transform_indices = @transform_12, window_bounds = array<i64: 64, 32>}, {pipeline_mode = #tpu.pipeline_mode<synchronous>, transform_indices = @transform_13, window_bounds = array<i64: 1, 32>}, {pipeline_mode = #tpu.pipeline_mode<synchronous>, transform_indices = @transform_14, window_bounds = array<i64: 1, 32>}, {pipeline_mode = #tpu.pipeline_mode<synchronous>, transform_indices = @transform_15, window_bounds = array<i64: 1, 32>}, {pipeline_mode = #tpu.pipeline_mode<synchronous>, transform_indices = @transform_16, window_bounds = array<i64: 32, 6>}, {pipeline_mode = #tpu.pipeline_mode<synchronous>, transform_indices = @transform_17, window_bounds = array<i64: 1, 6>}, {transform_indices = @transform_18, window_bounds = array<i64: 8, 32>}, {transform_indices = @transform_19, window_bounds = array<i64: 8, 6>}]} {
    %c0 = arith.constant 0 : index
    %c0_0 = arith.constant 0 : index
    %0 = vector.load %arg1[%c0, %c0_0] : memref<8x8xf32, #tpu.memory_space<vmem>>, vector<8x8xf32>
    %c0_1 = arith.constant 0 : index
    %c0_2 = arith.constant 0 : index
    %1 = vector.load %arg2[%c0_1, %c0_2] : memref<8x32xf32, #tpu.memory_space<vmem>>, vector<8x32xf32>
    %cst = arith.constant dense<0.000000e+00> : vector<8x32xf32>
    %2 = tpu.matmul %0, %1, %cst {dimension_numbers = #tpu.dot_dimension_numbers<[1], [0], [0], [1], [0, 0, 1, 1], [], []>} : vector<8x8xf32>, vector<8x32xf32>, vector<8x32xf32> -> vector<8x32xf32>
    %c0_3 = arith.constant 0 : index
    %c0_4 = arith.constant 0 : index
    %3 = vector.load %arg3[%c0_3, %c0_4] : memref<1x32xf32, #tpu.memory_space<vmem>>, vector<1x32xf32>
    %4 = vector.broadcast %3 : vector<1x32xf32> to vector<8x32xf32>
    %5 = arith.addf %2, %4 : vector<8x32xf32>
    %cst_5 = arith.constant 5.000000e-01 : f32
    %6 = vector.broadcast %cst_5 : f32 to vector<8x32xf32>
    %7 = arith.mulf %6, %5 : vector<8x32xf32>
    %cst_6 = arith.constant 4.471500e-02 : f32
    %8 = vector.broadcast %cst_6 : f32 to vector<8x32xf32>
    %9 = arith.mulf %8, %5 : vector<8x32xf32>
    %10 = arith.mulf %9, %5 : vector<8x32xf32>
    %11 = arith.mulf %10, %5 : vector<8x32xf32>
    %12 = arith.addf %5, %11 : vector<8x32xf32>
    %cst_7 = arith.constant 0.797884583 : f32
    %13 = vector.broadcast %cst_7 : f32 to vector<8x32xf32>
    %14 = arith.mulf %13, %12 : vector<8x32xf32>
    %15 = math.tanh %14 : vector<8x32xf32>
    %cst_8 = arith.constant 1.000000e+00 : f32
    %16 = vector.broadcast %cst_8 : f32 to vector<8x32xf32>
    %17 = arith.addf %16, %15 : vector<8x32xf32>
    %18 = arith.mulf %7, %17 : vector<8x32xf32>
    %c0_9 = arith.constant 0 : index
    %c0_10 = arith.constant 0 : index
    %19 = vector.load %arg4[%c0_9, %c0_10] : memref<32x32xf32, #tpu.memory_space<vmem>>, vector<32x32xf32>
    %cst_11 = arith.constant dense<0.000000e+00> : vector<8x32xf32>
    %20 = tpu.matmul %18, %19, %cst_11 {dimension_numbers = #tpu.dot_dimension_numbers<[1], [0], [0], [1], [0, 0, 1, 1], [], []>} : vector<8x32xf32>, vector<32x32xf32>, vector<8x32xf32> -> vector<8x32xf32>
    %c0_12 = arith.constant 0 : index
    %c0_13 = arith.constant 0 : index
    %21 = vector.load %arg5[%c0_12, %c0_13] : memref<1x32xf32, #tpu.memory_space<vmem>>, vector<1x32xf32>
    %22 = vector.broadcast %21 : vector<1x32xf32> to vector<8x32xf32>
    %23 = arith.addf %20, %22 : vector<8x32xf32>
    %cst_14 = arith.constant 5.000000e-01 : f32
    %24 = vector.broadcast %cst_14 : f32 to vector<8x32xf32>
    %25 = arith.mulf %24, %23 : vector<8x32xf32>
    %cst_15 = arith.constant 4.471500e-02 : f32
    %26 = vector.broadcast %cst_15 : f32 to vector<8x32xf32>
    %27 = arith.mulf %26, %23 : vector<8x32xf32>
    %28 = arith.mulf %27, %23 : vector<8x32xf32>
    %29 = arith.mulf %28, %23 : vector<8x32xf32>
    %30 = arith.addf %23, %29 : vector<8x32xf32>
    %cst_16 = arith.constant 0.797884583 : f32
    %31 = vector.broadcast %cst_16 : f32 to vector<8x32xf32>
    %32 = arith.mulf %31, %30 : vector<8x32xf32>
    %33 = math.tanh %32 : vector<8x32xf32>
    %cst_17 = arith.constant 1.000000e+00 : f32
    %34 = vector.broadcast %cst_17 : f32 to vector<8x32xf32>
    %35 = arith.addf %34, %33 : vector<8x32xf32>
    %36 = arith.mulf %25, %35 : vector<8x32xf32>
    %c0_18 = arith.constant 0 : index
    %c0_19 = arith.constant 0 : index
    %37 = vector.load %arg6[%c0_18, %c0_19] : memref<32x32xf32, #tpu.memory_space<vmem>>, vector<32x32xf32>
    %cst_20 = arith.constant dense<0.000000e+00> : vector<8x32xf32>
    %38 = tpu.matmul %36, %37, %cst_20 {dimension_numbers = #tpu.dot_dimension_numbers<[1], [0], [0], [1], [0, 0, 1, 1], [], []>} : vector<8x32xf32>, vector<32x32xf32>, vector<8x32xf32> -> vector<8x32xf32>
    %c0_21 = arith.constant 0 : index
    %c0_22 = arith.constant 0 : index
    %39 = vector.load %arg7[%c0_21, %c0_22] : memref<1x32xf32, #tpu.memory_space<vmem>>, vector<1x32xf32>
    %c0_23 = arith.constant 0 : index
    %c0_24 = arith.constant 0 : index
    %40 = vector.load %arg8[%c0_23, %c0_24] : memref<1x32xf32, #tpu.memory_space<vmem>>, vector<1x32xf32>
    %cst_25 = arith.constant dense<0.000000e+00> : vector<8xf32>
    %41 = vector.multi_reduction <add>, %38, %cst_25 [1] : vector<8x32xf32> to vector<8xf32>
    %42 = vector.shape_cast %41 : vector<8xf32> to vector<8x1xf32>
    %cst_26 = arith.constant 3.200000e+01 : f32
    %43 = vector.broadcast %cst_26 : f32 to vector<8x1xf32>
    %44 = arith.divf %42, %43 : vector<8x1xf32>
    %45 = vector.broadcast %44 : vector<8x1xf32> to vector<8x32xf32>
    %46 = arith.subf %38, %45 : vector<8x32xf32>
    %47 = arith.mulf %46, %46 : vector<8x32xf32>
    %cst_27 = arith.constant dense<0.000000e+00> : vector<8xf32>
    %48 = vector.multi_reduction <add>, %47, %cst_27 [1] : vector<8x32xf32> to vector<8xf32>
    %49 = vector.shape_cast %48 : vector<8xf32> to vector<8x1xf32>
    %cst_28 = arith.constant 3.200000e+01 : f32
    %50 = vector.broadcast %cst_28 : f32 to vector<8x1xf32>
    %51 = arith.divf %49, %50 : vector<8x1xf32>
    %cst_29 = arith.constant 9.99999974E-6 : f32
    %52 = vector.broadcast %cst_29 : f32 to vector<8x1xf32>
    %53 = arith.addf %51, %52 : vector<8x1xf32>
    %54 = math.rsqrt %53 : vector<8x1xf32>
    %55 = vector.broadcast %54 : vector<8x1xf32> to vector<8x32xf32>
    %56 = arith.mulf %46, %55 : vector<8x32xf32>
    %57 = vector.broadcast %39 : vector<1x32xf32> to vector<8x32xf32>
    %58 = arith.mulf %56, %57 : vector<8x32xf32>
    %59 = vector.broadcast %40 : vector<1x32xf32> to vector<8x32xf32>
    %60 = arith.addf %58, %59 : vector<8x32xf32>
    %61 = arith.addf %36, %60 : vector<8x32xf32>
    %c0_30 = arith.constant 0 : index
    %c0_31 = arith.constant 0 : index
    %62 = vector.load %arg9[%c0_30, %c0_31] : memref<1x32xf32, #tpu.memory_space<vmem>>, vector<1x32xf32>
    %c0_32 = arith.constant 0 : index
    %c0_33 = arith.constant 0 : index
    %63 = vector.load %arg10[%c0_32, %c0_33] : memref<1x32xf32, #tpu.memory_space<vmem>>, vector<1x32xf32>
    %cst_34 = arith.constant dense<0.000000e+00> : vector<8xf32>
    %64 = vector.multi_reduction <add>, %61, %cst_34 [1] : vector<8x32xf32> to vector<8xf32>
    %65 = vector.shape_cast %64 : vector<8xf32> to vector<8x1xf32>
    %cst_35 = arith.constant 3.200000e+01 : f32
    %66 = vector.broadcast %cst_35 : f32 to vector<8x1xf32>
    %67 = arith.divf %65, %66 : vector<8x1xf32>
    %68 = vector.broadcast %67 : vector<8x1xf32> to vector<8x32xf32>
    %69 = arith.subf %61, %68 : vector<8x32xf32>
    %70 = arith.mulf %69, %69 : vector<8x32xf32>
    %cst_36 = arith.constant dense<0.000000e+00> : vector<8xf32>
    %71 = vector.multi_reduction <add>, %70, %cst_36 [1] : vector<8x32xf32> to vector<8xf32>
    %72 = vector.shape_cast %71 : vector<8xf32> to vector<8x1xf32>
    %cst_37 = arith.constant 3.200000e+01 : f32
    %73 = vector.broadcast %cst_37 : f32 to vector<8x1xf32>
    %74 = arith.divf %72, %73 : vector<8x1xf32>
    %cst_38 = arith.constant 9.99999974E-6 : f32
    %75 = vector.broadcast %cst_38 : f32 to vector<8x1xf32>
    %76 = arith.addf %74, %75 : vector<8x1xf32>
    %77 = math.rsqrt %76 : vector<8x1xf32>
    %78 = vector.broadcast %77 : vector<8x1xf32> to vector<8x32xf32>
    %79 = arith.mulf %69, %78 : vector<8x32xf32>
    %80 = vector.broadcast %62 : vector<1x32xf32> to vector<8x32xf32>
    %81 = arith.mulf %79, %80 : vector<8x32xf32>
    %82 = vector.broadcast %63 : vector<1x32xf32> to vector<8x32xf32>
    %83 = arith.addf %81, %82 : vector<8x32xf32>
    %c0_39 = arith.constant 0 : index
    %c0_40 = arith.constant 0 : index
    %84 = vector.load %arg11[%c0_39, %c0_40] : memref<32x64xf32, #tpu.memory_space<vmem>>, vector<32x64xf32>
    %cst_41 = arith.constant dense<0.000000e+00> : vector<8x64xf32>
    %85 = tpu.matmul %83, %84, %cst_41 {dimension_numbers = #tpu.dot_dimension_numbers<[1], [0], [0], [1], [0, 0, 1, 1], [], []>} : vector<8x32xf32>, vector<32x64xf32>, vector<8x64xf32> -> vector<8x64xf32>
    %c0_42 = arith.constant 0 : index
    %c0_43 = arith.constant 0 : index
    %86 = vector.load %arg12[%c0_42, %c0_43] : memref<1x64xf32, #tpu.memory_space<vmem>>, vector<1x64xf32>
    %87 = vector.broadcast %86 : vector<1x64xf32> to vector<8x64xf32>
    %88 = arith.addf %85, %87 : vector<8x64xf32>
    %cst_44 = arith.constant 0.000000e+00 : f32
    %89 = vector.broadcast %cst_44 : f32 to vector<8x64xf32>
    %90 = arith.maximumf %88, %89 : vector<8x64xf32>
    %c0_45 = arith.constant 0 : index
    %c0_46 = arith.constant 0 : index
    %91 = vector.load %arg13[%c0_45, %c0_46] : memref<64x32xf32, #tpu.memory_space<vmem>>, vector<64x32xf32>
    %cst_47 = arith.constant dense<0.000000e+00> : vector<8x32xf32>
    %92 = tpu.matmul %90, %91, %cst_47 {dimension_numbers = #tpu.dot_dimension_numbers<[1], [0], [0], [1], [0, 0, 1, 1], [], []>} : vector<8x64xf32>, vector<64x32xf32>, vector<8x32xf32> -> vector<8x32xf32>
    %c0_48 = arith.constant 0 : index
    %c0_49 = arith.constant 0 : index
    %93 = vector.load %arg14[%c0_48, %c0_49] : memref<1x32xf32, #tpu.memory_space<vmem>>, vector<1x32xf32>
    %94 = vector.broadcast %93 : vector<1x32xf32> to vector<8x32xf32>
    %95 = arith.addf %92, %94 : vector<8x32xf32>
    %96 = arith.addf %83, %95 : vector<8x32xf32>
    %c0_50 = arith.constant 0 : index
    %c0_51 = arith.constant 0 : index
    %97 = vector.load %arg15[%c0_50, %c0_51] : memref<1x32xf32, #tpu.memory_space<vmem>>, vector<1x32xf32>
    %c0_52 = arith.constant 0 : index
    %c0_53 = arith.constant 0 : index
    %98 = vector.load %arg16[%c0_52, %c0_53] : memref<1x32xf32, #tpu.memory_space<vmem>>, vector<1x32xf32>
    %cst_54 = arith.constant dense<0.000000e+00> : vector<8xf32>
    %99 = vector.multi_reduction <add>, %96, %cst_54 [1] : vector<8x32xf32> to vector<8xf32>
    %100 = vector.shape_cast %99 : vector<8xf32> to vector<8x1xf32>
    %cst_55 = arith.constant 3.200000e+01 : f32
    %101 = vector.broadcast %cst_55 : f32 to vector<8x1xf32>
    %102 = arith.divf %100, %101 : vector<8x1xf32>
    %103 = vector.broadcast %102 : vector<8x1xf32> to vector<8x32xf32>
    %104 = arith.subf %96, %103 : vector<8x32xf32>
    %105 = arith.mulf %104, %104 : vector<8x32xf32>
    %cst_56 = arith.constant dense<0.000000e+00> : vector<8xf32>
    %106 = vector.multi_reduction <add>, %105, %cst_56 [1] : vector<8x32xf32> to vector<8xf32>
    %107 = vector.shape_cast %106 : vector<8xf32> to vector<8x1xf32>
    %cst_57 = arith.constant 3.200000e+01 : f32
    %108 = vector.broadcast %cst_57 : f32 to vector<8x1xf32>
    %109 = arith.divf %107, %108 : vector<8x1xf32>
    %cst_58 = arith.constant 9.99999974E-6 : f32
    %110 = vector.broadcast %cst_58 : f32 to vector<8x1xf32>
    %111 = arith.addf %109, %110 : vector<8x1xf32>
    %112 = math.rsqrt %111 : vector<8x1xf32>
    %113 = vector.broadcast %112 : vector<8x1xf32> to vector<8x32xf32>
    %114 = arith.mulf %104, %113 : vector<8x32xf32>
    %115 = vector.broadcast %97 : vector<1x32xf32> to vector<8x32xf32>
    %116 = arith.mulf %114, %115 : vector<8x32xf32>
    %117 = vector.broadcast %98 : vector<1x32xf32> to vector<8x32xf32>
    %118 = arith.addf %116, %117 : vector<8x32xf32>
    %c0_59 = arith.constant 0 : index
    %c0_60 = arith.constant 0 : index
    %119 = vector.load %arg19[%c0_59, %c0_60] : memref<8x32xf32, #tpu.memory_space<vmem>>, vector<8x32xf32>
    tpu.vector_store %arg19[%c0_59, %c0_60], %118 {strides = array<i32>} : memref<8x32xf32, #tpu.memory_space<vmem>>, vector<8x32xf32>,
    %c0_61 = arith.constant 0 : index
    %c0_62 = arith.constant 0 : index
    %120 = vector.load %arg17[%c0_61, %c0_62] : memref<32x6xf32, #tpu.memory_space<vmem>>, vector<32x6xf32>
    %cst_63 = arith.constant dense<0.000000e+00> : vector<8x6xf32>
    %121 = tpu.matmul %118, %120, %cst_63 {dimension_numbers = #tpu.dot_dimension_numbers<[1], [0], [0], [1], [0, 0, 1, 1], [], []>} : vector<8x32xf32>, vector<32x6xf32>, vector<8x6xf32> -> vector<8x6xf32>
    %c0_64 = arith.constant 0 : index
    %c0_65 = arith.constant 0 : index
    %122 = vector.load %arg18[%c0_64, %c0_65] : memref<1x6xf32, #tpu.memory_space<vmem>>, vector<1x6xf32>
    %123 = vector.broadcast %122 : vector<1x6xf32> to vector<8x6xf32>
    %124 = arith.addf %121, %123 : vector<8x6xf32>
    %c0_66 = arith.constant 0 : index
    %c0_67 = arith.constant 0 : index
    %125 = vector.load %arg20[%c0_66, %c0_67] : memref<8x6xf32, #tpu.memory_space<vmem>>, vector<8x6xf32>
    tpu.vector_store %arg20[%c0_66, %c0_67], %124 {strides = array<i32>} : memref<8x6xf32, #tpu.memory_space<vmem>>, vector<8x6xf32>,
    return
  }
  func.func @transform_0(%arg0: i32) -> (i32, i32) {
    %c0_i32 = arith.constant 0 : i32
    %c0_i32_0 = arith.constant 0 : i32
    return %arg0, %c0_i32 : i32, i32
  }
  func.func @transform_1(%arg0: i32) -> (i32, i32) {
    %c0_i32 = arith.constant 0 : i32
    %c0_i32_0 = arith.constant 0 : i32
    %c0_i32_1 = arith.constant 0 : i32
    return %c0_i32, %c0_i32_0 : i32, i32
  }
  func.func @transform_2(%arg0: i32) -> (i32, i32) {
    %c0_i32 = arith.constant 0 : i32
    %c0_i32_0 = arith.constant 0 : i32
    %c0_i32_1 = arith.constant 0 : i32
    return %c0_i32, %c0_i32_0 : i32, i32
  }
  func.func @transform_3(%arg0: i32) -> (i32, i32) {
    %c0_i32 = arith.constant 0 : i32
    %c0_i32_0 = arith.constant 0 : i32
    %c0_i32_1 = arith.constant 0 : i32
    return %c0_i32, %c0_i32_0 : i32, i32
  }
  func.func @transform_4(%arg0: i32) -> (i32, i32) {
    %c0_i32 = arith.constant 0 : i32
    %c0_i32_0 = arith.constant 0 : i32
    %c0_i32_1 = arith.constant 0 : i32
    return %c0_i32, %c0_i32_0 : i32, i32
  }
  func.func @transform_5(%arg0: i32) -> (i32, i32) {
    %c0_i32 = arith.constant 0 : i32
    %c0_i32_0 = arith.constant 0 : i32
    %c0_i32_1 = arith.constant 0 : i32
    return %c0_i32, %c0_i32_0 : i32, i32
  }
  func.func @transform_6(%arg0: i32) -> (i32, i32) {
    %c0_i32 = arith.constant 0 : i32
    %c0_i32_0 = arith.constant 0 : i32
    %c0_i32_1 = arith.constant 0 : i32
    return %c0_i32, %c0_i32_0 : i32, i32
  }
  func.func @transform_7(%arg0: i32) -> (i32, i32) {
    %c0_i32 = arith.constant 0 : i32
    %c0_i32_0 = arith.constant 0 : i32
    %c0_i32_1 = arith.constant 0 : i32
    return %c0_i32, %c0_i32_0 : i32, i32
  }
  func.func @transform_8(%arg0: i32) -> (i32, i32) {
    %c0_i32 = arith.constant 0 : i32
    %c0_i32_0 = arith.constant 0 : i32
    %c0_i32_1 = arith.constant 0 : i32
    return %c0_i32, %c0_i32_0 : i32, i32
  }
  func.func @transform_9(%arg0: i32) -> (i32, i32) {
    %c0_i32 = arith.constant 0 : i32
    %c0_i32_0 = arith.constant 0 : i32
    %c0_i32_1 = arith.constant 0 : i32
    return %c0_i32, %c0_i32_0 : i32, i32
  }
  func.func @transform_10(%arg0: i32) -> (i32, i32) {
    %c0_i32 = arith.constant 0 : i32
    %c0_i32_0 = arith.constant 0 : i32
    %c0_i32_1 = arith.constant 0 : i32
    return %c0_i32, %c0_i32_0 : i32, i32
  }
  func.func @transform_11(%arg0: i32) -> (i32, i32) {
    %c0_i32 = arith.constant 0 : i32
    %c0_i32_0 = arith.constant 0 : i32
    %c0_i32_1 = arith.constant 0 : i32
    return %c0_i32, %c0_i32_0 : i32, i32
  }
  func.func @transform_12(%arg0: i32) -> (i32, i32) {
    %c0_i32 = arith.constant 0 : i32
    %c0_i32_0 = arith.constant 0 : i32
    %c0_i32_1 = arith.constant 0 : i32
    return %c0_i32, %c0_i32_0 : i32, i32
  }
  func.func @transform_13(%arg0: i32) -> (i32, i32) {
    %c0_i32 = arith.constant 0 : i32
    %c0_i32_0 = arith.constant 0 : i32
    %c0_i32_1 = arith.constant 0 : i32
    return %c0_i32, %c0_i32_0 : i32, i32
  }
  func.func @transform_14(%arg0: i32) -> (i32, i32) {
    %c0_i32 = arith.constant 0 : i32
    %c0_i32_0 = arith.constant 0 : i32
    %c0_i32_1 = arith.constant 0 : i32
    return %c0_i32, %c0_i32_0 : i32, i32
  }
  func.func @transform_15(%arg0: i32) -> (i32, i32) {
    %c0_i32 = arith.constant 0 : i32
    %c0_i32_0 = arith.constant 0 : i32
    %c0_i32_1 = arith.constant 0 : i32
    return %c0_i32, %c0_i32_0 : i32, i32
  }
  func.func @transform_16(%arg0: i32) -> (i32, i32) {
    %c0_i32 = arith.constant 0 : i32
    %c0_i32_0 = arith.constant 0 : i32
    %c0_i32_1 = arith.constant 0 : i32
    return %c0_i32, %c0_i32_0 : i32, i32
  }
  func.func @transform_17(%arg0: i32) -> (i32, i32) {
    %c0_i32 = arith.constant 0 : i32
    %c0_i32_0 = arith.constant 0 : i32
    %c0_i32_1 = arith.constant 0 : i32
    return %c0_i32, %c0_i32_0 : i32, i32
  }
  func.func @transform_18(%arg0: i32) -> (i32, i32) {
    %c0_i32 = arith.constant 0 : i32
    %c0_i32_0 = arith.constant 0 : i32
    return %arg0, %c0_i32 : i32, i32
  }
  func.func @transform_19(%arg0: i32) -> (i32, i32) {
    %c0_i32 = arith.constant 0 : i32
    %c0_i32_0 = arith.constant 0 : i32
    return %arg0, %c0_i32 : i32, i32
  }
}

</mosaic_0001>

<llo_original>
// kernel: tpu_custom_call.1
$region0: #{tpu_custom_call.1}
  #allocation0 [shape = 'u32[]', space=smem, size = 0x4, offset = 0x4, fixed_abs, tag = 'smem constant byte address 0x4 - core index']
  #allocation1 [shape = 'u32[144,128]{1,0:T(1,128)}', space=vmem, size = 0x12000, scoped, tag = 'internal scratch']
  %s0 = inlined_call_operand.vmem [shape: f32[8,8], index: 0, kind: input, shape index: {}]
  %s1 = inlined_call_operand.vmem [shape: f32[8,32], index: 1, kind: input, shape index: {}]
  %s2 = inlined_call_operand.vmem [shape: f32[1,32], index: 2, kind: input, shape index: {}]
  %s3 = inlined_call_operand.vmem [shape: f32[32,32], index: 3, kind: input, shape index: {}]
  %s4 = inlined_call_operand.vmem [shape: f32[1,32], index: 4, kind: input, shape index: {}]
  %s5 = inlined_call_operand.vmem [shape: f32[32,32], index: 5, kind: input, shape index: {}]
  %s6 = inlined_call_operand.vmem [shape: f32[1,32], index: 6, kind: input, shape index: {}]
  %s7 = inlined_call_operand.vmem [shape: f32[1,32], index: 7, kind: input, shape index: {}]
  %s8 = inlined_call_operand.vmem [shape: f32[1,32], index: 8, kind: input, shape index: {}]
  %s9 = inlined_call_operand.vmem [shape: f32[1,32], index: 9, kind: input, shape index: {}]
  %s10 = inlined_call_operand.vmem [shape: f32[32,64], index: 10, kind: input, shape index: {}]
  %s11 = inlined_call_operand.vmem [shape: f32[1,64], index: 11, kind: input, shape index: {}]
  %s12 = inlined_call_operand.vmem [shape: f32[64,32], index: 12, kind: input, shape index: {}]
  %s13 = inlined_call_operand.vmem [shape: f32[1,32], index: 13, kind: input, shape index: {}]
  %s14 = inlined_call_operand.vmem [shape: f32[1,32], index: 14, kind: input, shape index: {}]
  %s15 = inlined_call_operand.vmem [shape: f32[1,32], index: 15, kind: input, shape index: {}]
  %s16 = inlined_call_operand.vmem [shape: f32[32,6], index: 16, kind: input, shape index: {}]
  %s17 = inlined_call_operand.vmem [shape: f32[1,6], index: 17, kind: input, shape index: {}]
  %s18 = inlined_call_operand.hbm [shape: f32[8,32], index: 18, kind: output, shape index: {0}]
  %s19 = inlined_call_operand.hbm [shape: f32[8,6], index: 19, kind: output, shape index: {1}]
  %20 = xla_tuple %s18, %s19
  %s21 = sld [smem:[#allocation0]]
  $region90: #{tpu_custom_call.1} parent=0
    _
  %s23 = ssub.s32 1, %s21
  %s24 = scalar_select 0, %s23, %s21
  $region1: #{tpu_custom_call.1} parent=0
    #allocation2 [shape = 'u8[4096]{0}', space=vmem, size = 0x1000, scoped, tag = 'output window, operand 0, single buffered']
    #allocation3 [shape = 's32[1]{0}', space=sflag, size = 0x4, scoped, tag = 'scoped memory for tpu_custom_call.1']
    #allocation4 [shape = 'u8[4096]{0}', space=vmem, size = 0x1000, scoped, tag = 'output window, operand 1, single buffered']
    #allocation5 [shape = 's32[1]{0}', space=sflag, size = 0x4, scoped, tag = 'scoped memory for tpu_custom_call.1']
    %25 = vsyncpa [#allocation3], 0
    %26 = vsyncpa [#allocation5], 0
    // Predicated region
    $region2: #{tpu_custom_call.1} parent=1 // pred_check
      _
    $region3: #{tpu_custom_call.1} parent=1 // pred_check_branch
      %28 = sbr.rel (0) target = $region5
    $region4: #{tpu_custom_call.1} parent=1 // pred_region
      _
    $region5: #{tpu_custom_call.1} parent=1 // pred_fallthru
      _
    // Predicated region
    $region6: #{tpu_custom_call.1} parent=1 // pred_check
      _
    $region7: #{tpu_custom_call.1} parent=1 // pred_check_branch
      %30 = sbr.rel (0) target = $region9
    $region8: #{tpu_custom_call.1} parent=1 // pred_region
      _
    $region9: #{tpu_custom_call.1} parent=1 // pred_fallthru
      _
    // Predicated region
    $region10: #{tpu_custom_call.1} parent=1 // pred_check
      _
    $region11: #{tpu_custom_call.1} parent=1 // pred_check_branch
      %32 = sbr.rel (0) target = $region13
    $region12: #{tpu_custom_call.1} parent=1 // pred_region
      _
    $region13: #{tpu_custom_call.1} parent=1 // pred_fallthru
      _
    // Predicated region
    $region14: #{tpu_custom_call.1} parent=1 // pred_check
      _
    $region15: #{tpu_custom_call.1} parent=1 // pred_check_branch
      %34 = sbr.rel (0) target = $region17
    $region16: #{tpu_custom_call.1} parent=1 // pred_region
      _
    $region17: #{tpu_custom_call.1} parent=1 // pred_fallthru
      _
    // Predicated region
    $region18: #{tpu_custom_call.1} parent=1 // pred_check
      _
    $region19: #{tpu_custom_call.1} parent=1 // pred_check_branch
      %36 = sbr.rel (0) target = $region21
    $region20: #{tpu_custom_call.1} parent=1 // pred_region
      _
    $region21: #{tpu_custom_call.1} parent=1 // pred_fallthru
      _
    // Predicated region
    $region22: #{tpu_custom_call.1} parent=1 // pred_check
      _
    $region23: #{tpu_custom_call.1} parent=1 // pred_check_branch
      %38 = sbr.rel (0) target = $region25
    $region24: #{tpu_custom_call.1} parent=1 // pred_region
      _
    $region25: #{tpu_custom_call.1} parent=1 // pred_fallthru
      _
    // Predicated region
    $region26: #{tpu_custom_call.1} parent=1 // pred_check
      _
    $region27: #{tpu_custom_call.1} parent=1 // pred_check_branch
      %40 = sbr.rel (0) target = $region29
    $region28: #{tpu_custom_call.1} parent=1 // pred_region
      _
    $region29: #{tpu_custom_call.1} parent=1 // pred_fallthru
      _
    // Predicated region
    $region30: #{tpu_custom_call.1} parent=1 // pred_check
      _
    $region31: #{tpu_custom_call.1} parent=1 // pred_check_branch
      %42 = sbr.rel (0) target = $region33
    $region32: #{tpu_custom_call.1} parent=1 // pred_region
      _
    $region33: #{tpu_custom_call.1} parent=1 // pred_fallthru
      _
    // Predicated region
    $region34: #{tpu_custom_call.1} parent=1 // pred_check
      _
    $region35: #{tpu_custom_call.1} parent=1 // pred_check_branch
      %44 = sbr.rel (0) target = $region37
    $region36: #{tpu_custom_call.1} parent=1 // pred_region
      _
    $region37: #{tpu_custom_call.1} parent=1 // pred_fallthru
      _
    // Predicated region
    $region38: #{tpu_custom_call.1} parent=1 // pred_check
      _
    $region39: #{tpu_custom_call.1} parent=1 // pred_check_branch
      %46 = sbr.rel (0) target = $region41
    $region40: #{tpu_custom_call.1} parent=1 // pred_region
      _
    $region41: #{tpu_custom_call.1} parent=1 // pred_fallthru
      _
    // Predicated region
    $region42: #{tpu_custom_call.1} parent=1 // pred_check
      _
    $region43: #{tpu_custom_call.1} parent=1 // pred_check_branch
      %48 = sbr.rel (0) target = $region45
    $region44: #{tpu_custom_call.1} parent=1 // pred_region
      _
    $region45: #{tpu_custom_call.1} parent=1 // pred_fallthru
      _
    // Predicated region
    $region46: #{tpu_custom_call.1} parent=1 // pred_check
      _
    $region47: #{tpu_custom_call.1} parent=1 // pred_check_branch
      %50 = sbr.rel (0) target = $region49
    $region48: #{tpu_custom_call.1} parent=1 // pred_region
      _
    $region49: #{tpu_custom_call.1} parent=1 // pred_fallthru
      _
    // Predicated region
    $region50: #{tpu_custom_call.1} parent=1 // pred_check
      _
    $region51: #{tpu_custom_call.1} parent=1 // pred_check_branch
      %52 = sbr.rel (0) target = $region53
    $region52: #{tpu_custom_call.1} parent=1 // pred_region
      _
    $region53: #{tpu_custom_call.1} parent=1 // pred_fallthru
      _
    // Predicated region
    $region54: #{tpu_custom_call.1} parent=1 // pred_check
      _
    $region55: #{tpu_custom_call.1} parent=1 // pred_check_branch
      %54 = sbr.rel (0) target = $region57
    $region56: #{tpu_custom_call.1} parent=1 // pred_region
      _
    $region57: #{tpu_custom_call.1} parent=1 // pred_fallthru
      _
    // Predicated region
    $region58: #{tpu_custom_call.1} parent=1 // pred_check
      _
    $region59: #{tpu_custom_call.1} parent=1 // pred_check_branch
      %56 = sbr.rel (0) target = $region61
    $region60: #{tpu_custom_call.1} parent=1 // pred_region
      _
    $region61: #{tpu_custom_call.1} parent=1 // pred_fallthru
      _
    // Predicated region
    $region62: #{tpu_custom_call.1} parent=1 // pred_check
      _
    $region63: #{tpu_custom_call.1} parent=1 // pred_check_branch
      %58 = sbr.rel (0) target = $region65
    $region64: #{tpu_custom_call.1} parent=1 // pred_region
      _
    $region65: #{tpu_custom_call.1} parent=1 // pred_fallthru
      _
    // Predicated region
    $region66: #{tpu_custom_call.1} parent=1 // pred_check
      _
    $region67: #{tpu_custom_call.1} parent=1 // pred_check_branch
      %60 = sbr.rel (0) target = $region69
    $region68: #{tpu_custom_call.1} parent=1 // pred_region
      _
    $region69: #{tpu_custom_call.1} parent=1 // pred_fallthru
      _
    // Predicated region
    $region70: #{tpu_custom_call.1} parent=1 // pred_check
      _
    $region71: #{tpu_custom_call.1} parent=1 // pred_check_branch
      %62 = sbr.rel (0) target = $region73
    $region72: #{tpu_custom_call.1} parent=1 // pred_region
      _
    $region73: #{tpu_custom_call.1} parent=1 // pred_fallthru
      _
    %v63 = vld [vmem:[%s0] sm:$0xff]
    %v64 = vld [vmem:[%s1] sm:$0xff]
    %v65 = vld [vmem:[%s2] sm:$0x1]
    %v67 = vlaneseq
    %v68 = vshrl.u32 %v67, 7
    %v69 = vsub.s32 0, %v68
    %v70 = vrot.slane %v65, %v69
    %vm72 = vcmask 64512
    %v74 = vsel %vm72, %v63, 0
    %76 = vmatprep.subr.mxu0 0.0
    %77 = vmatpush1.msra.mxu0 %v64
    %78 = vmatprep.subr.mxu0 0.0
    %79 = vmatpush1.msra.mxu0 0.0
    %80 = vmatprep.subr.mxu0 0.0
    %81 = vmatpush1.msra.mxu0 0.0
    %82 = vmatprep.subr.mxu0 0.0
    %83 = vmatpush1.msra.mxu0 0.0
    %84 = vmatprep.subr.mxu0 0.0
    %85 = vmatpush1.msra.mxu0 0.0
    %86 = vmatprep.subr.mxu0 0.0
    %87 = vmatpush1.msra.mxu0 0.0
    %88 = vmatprep.subr.mxu0 0.0
    %89 = vmatpush1.msra.mxu0 0.0
    %90 = vmatprep.subr.mxu0 0.0
    %91 = vmatpush1.msra.mxu0 0.0
    %92 = vmatprep.subr.mxu0 0.0
    %93 = vmatpush1.msra.mxu0 0.0
    %94 = vmatprep.subr.mxu0 0.0
    %95 = vmatpush1.msra.mxu0 0.0
    %96 = vmatprep.subr.mxu0 0.0
    %97 = vmatpush1.msra.mxu0 0.0
    %98 = vmatprep.subr.mxu0 0.0
    %99 = vmatpush1.msra.mxu0 0.0
    %100 = vmatprep.subr.mxu0 0.0
    %101 = vmatpush1.msra.mxu0 0.0
    %102 = vmatprep.subr.mxu0 0.0
    %103 = vmatpush1.msra.mxu0 0.0
    %104 = vmatprep.subr.mxu0 0.0
    %105 = vmatpush1.msra.mxu0 0.0
    %106 = vmatprep.subr.mxu0 0.0
    %107 = vmatpush1.msra.mxu0 0.0
    %108 = vmatprep.subr.mxu0 0.0
    %109 = vmatpush1.msra.mxu0 0.0
    %110 = vmatprep.subr.mxu0 0.0
    %111 = vmatpush1.msra.mxu0 0.0
    %112 = vmatprep.subr.mxu0 0.0
    %113 = vmatpush1.msra.mxu0 0.0
    %114 = vmatprep.subr.mxu0 0.0
    %115 = vmatpush1.msra.mxu0 0.0
    %116 = vmatprep.subr.mxu0 0.0
    %117 = vmatpush1.msra.mxu0 0.0
    %118 = vmatprep.subr.mxu0 0.0
    %119 = vmatpush1.msra.mxu0 0.0
    %120 = vmatprep.subr.mxu0 0.0
    %121 = vmatpush1.msra.mxu0 0.0
    %122 = vmatprep.subr.mxu0 0.0
    %123 = vmatpush1.msra.mxu0 0.0
    %124 = vmatprep.subr.mxu0 0.0
    %125 = vmatpush1.msra.mxu0 0.0
    %126 = vmatprep.subr.mxu0 0.0
    %127 = vmatpush1.msra.mxu0 0.0
    %128 = vmatprep.subr.mxu0 0.0
    %129 = vmatpush1.msra.mxu0 0.0
    %130 = vmatprep.subr.mxu0 0.0
    %131 = vmatpush1.msra.mxu0 0.0
    %132 = vmatprep.subr.mxu0 0.0
    %133 = vmatpush1.msra.mxu0 0.0
    %134 = vmatprep.subr.mxu0 0.0
    %135 = vmatpush1.msra.mxu0 0.0
    %136 = vmatprep.subr.mxu0 0.0
    %137 = vmatpush1.msra.mxu0 0.0
    %138 = vmatprep.subr.mxu0 0.0
    %139 = vmatpush1.msra.mxu0 0.0
    %140 = vmatprep.mubr.f32.mxu0 0.0
    %141 = vmatmul.mubr.f32.gmra.mrb[0].mxu0 %v74
    %v142 = vpop.f32.mrb[0].mxu0
    %v143 = vadd.f32 %v70, %v142
    %v144 = vpop.f32.mrb[0].mxu0
    %145 = vdwg.mxu0
    %v146 = vmul.f32 %v143, 0.5
    %v147 = vmul.f32 %v143, 0.044715
    %v148 = vmul.f32 %v147, %v143
    %v149 = vmul.f32 %v148, %v143
    %v150 = vadd.f32 %v143, %v149
    %v151 = vmul.f32 %v150, 0.7978846
    %v152 = vtanh.pop %v151
    %v153 = vadd.f32 %v152, 1.0
    %v154 = vmul.f32 %v146, %v153
    %v155 = vld [vmem:[%s3] sm:$0xff]
    %v156 = vld [vmem:[%s3 + $0x8] sm:$0xff]
    %v157 = vld [vmem:[%s3 + $0x10] sm:$0xff]
    %v158 = vld [vmem:[%s3 + $0x18] sm:$0xff]
    %v159 = vld [vmem:[%s4] sm:$0x1]
    %v161 = vlaneseq
    %v162 = vshrl.u32 %v161, 7
    %v163 = vsub.s32 0, %v162
    %v164 = vrot.slane %v159, %v163
    %vm166 = vcmask 261120
    %v168 = vsel %vm166, %v154, 0
    %170 = vmatprep.subr.mxu0 0.0
    %171 = vmatpush1.msra.mxu0 %v155
    %172 = vmatprep.subr.mxu0 0.0
    %173 = vmatpush1.msra.mxu0 %v156
    %174 = vmatprep.subr.mxu0 0.0
    %175 = vmatpush1.msra.mxu0 %v157
    %176 = vmatprep.subr.mxu0 0.0
    %177 = vmatpush1.msra.mxu0 %v158
    %178 = vmatprep.subr.mxu0 0.0
    %179 = vmatpush1.msra.mxu0 0.0
    %180 = vmatprep.subr.mxu0 0.0
    %181 = vmatpush1.msra.mxu0 0.0
    %182 = vmatprep.subr.mxu0 0.0
    %183 = vmatpush1.msra.mxu0 0.0
    %184 = vmatprep.subr.mxu0 0.0
    %185 = vmatpush1.msra.mxu0 0.0
    %186 = vmatprep.subr.mxu0 0.0
    %187 = vmatpush1.msra.mxu0 0.0
    %188 = vmatprep.subr.mxu0 0.0
    %189 = vmatpush1.msra.mxu0 0.0
    %190 = vmatprep.subr.mxu0 0.0
    %191 = vmatpush1.msra.mxu0 0.0
    %192 = vmatprep.subr.mxu0 0.0
    %193 = vmatpush1.msra.mxu0 0.0
    %194 = vmatprep.subr.mxu0 0.0
    %195 = vmatpush1.msra.mxu0 0.0
    %196 = vmatprep.subr.mxu0 0.0
    %197 = vmatpush1.msra.mxu0 0.0
    %198 = vmatprep.subr.mxu0 0.0
    %199 = vmatpush1.msra.mxu0 0.0
    %200 = vmatprep.subr.mxu0 0.0
    %201 = vmatpush1.msra.mxu0 0.0
    %202 = vmatprep.subr.mxu0 0.0
    %203 = vmatpush1.msra.mxu0 0.0
    %204 = vmatprep.subr.mxu0 0.0
    %205 = vmatpush1.msra.mxu0 0.0
    %206 = vmatprep.subr.mxu0 0.0
    %207 = vmatpush1.msra.mxu0 0.0
    %208 = vmatprep.subr.mxu0 0.0
    %209 = vmatpush1.msra.mxu0 0.0
    %210 = vmatprep.subr.mxu0 0.0
    %211 = vmatpush1.msra.mxu0 0.0
    %212 = vmatprep.subr.mxu0 0.0
    %213 = vmatpush1.msra.mxu0 0.0
    %214 = vmatprep.subr.mxu0 0.0
    %215 = vmatpush1.msra.mxu0 0.0
    %216 = vmatprep.subr.mxu0 0.0
    %217 = vmatpush1.msra.mxu0 0.0
    %218 = vmatprep.subr.mxu0 0.0
    %219 = vmatpush1.msra.mxu0 0.0
    %220 = vmatprep.subr.mxu0 0.0
    %221 = vmatpush1.msra.mxu0 0.0
    %222 = vmatprep.subr.mxu0 0.0
    %223 = vmatpush1.msra.mxu0 0.0
    %224 = vmatprep.subr.mxu0 0.0
    %225 = vmatpush1.msra.mxu0 0.0
    %226 = vmatprep.subr.mxu0 0.0
    %227 = vmatpush1.msra.mxu0 0.0
    %228 = vmatprep.subr.mxu0 0.0
    %229 = vmatpush1.msra.mxu0 0.0
    %230 = vmatprep.subr.mxu0 0.0
    %231 = vmatpush1.msra.mxu0 0.0
    %232 = vmatprep.subr.mxu0 0.0
    %233 = vmatpush1.msra.mxu0 0.0
    %234 = vmatprep.mubr.f32.mxu0 0.0
    %235 = vmatmul.mubr.f32.gmra.mrb[0].mxu0 %v168
    %v236 = vpop.f32.mrb[0].mxu0
    %v237 = vadd.f32 %v164, %v236
    %v238 = vpop.f32.mrb[0].mxu0
    %239 = vdwg.mxu0
    %v240 = vmul.f32 %v237, 0.5
    %v241 = vmul.f32 %v237, 0.044715
    %v242 = vmul.f32 %v241, %v237
    %v243 = vmul.f32 %v242, %v237
    %v244 = vadd.f32 %v237, %v243
    %v245 = vmul.f32 %v244, 0.7978846
    %v246 = vtanh.pop %v245
    %v247 = vadd.f32 %v246, 1.0
    %v248 = vmul.f32 %v240, %v247
    %v249 = vld [vmem:[%s5] sm:$0xff]
    %v250 = vld [vmem:[%s5 + $0x8] sm:$0xff]
    %v251 = vld [vmem:[%s5 + $0x10] sm:$0xff]
    %v252 = vld [vmem:[%s5 + $0x18] sm:$0xff]
    %v254 = vsel %vm166, %v248, 0
    %256 = vmatprep.subr.mxu0 0.0
    %257 = vmatpush1.msra.mxu0 %v249
    %258 = vmatprep.subr.mxu0 0.0
    %259 = vmatpush1.msra.mxu0 %v250
    %260 = vmatprep.subr.mxu0 0.0
    %261 = vmatpush1.msra.mxu0 %v251
    %262 = vmatprep.subr.mxu0 0.0
    %263 = vmatpush1.msra.mxu0 %v252
    %264 = vmatprep.subr.mxu0 0.0
    %265 = vmatpush1.msra.mxu0 0.0
    %266 = vmatprep.subr.mxu0 0.0
    %267 = vmatpush1.msra.mxu0 0.0
    %268 = vmatprep.subr.mxu0 0.0
    %269 = vmatpush1.msra.mxu0 0.0
    %270 = vmatprep.subr.mxu0 0.0
    %271 = vmatpush1.msra.mxu0 0.0
    %272 = vmatprep.subr.mxu0 0.0
    %273 = vmatpush1.msra.mxu0 0.0
    %274 = vmatprep.subr.mxu0 0.0
    %275 = vmatpush1.msra.mxu0 0.0
    %276 = vmatprep.subr.mxu0 0.0
    %277 = vmatpush1.msra.mxu0 0.0
    %278 = vmatprep.subr.mxu0 0.0
    %279 = vmatpush1.msra.mxu0 0.0
    %280 = vmatprep.subr.mxu0 0.0
    %281 = vmatpush1.msra.mxu0 0.0
    %282 = vmatprep.subr.mxu0 0.0
    %283 = vmatpush1.msra.mxu0 0.0
    %284 = vmatprep.subr.mxu0 0.0
    %285 = vmatpush1.msra.mxu0 0.0
    %286 = vmatprep.subr.mxu0 0.0
    %287 = vmatpush1.msra.mxu0 0.0
    %288 = vmatprep.subr.mxu0 0.0
    %289 = vmatpush1.msra.mxu0 0.0
    %290 = vmatprep.subr.mxu0 0.0
    %291 = vmatpush1.msra.mxu0 0.0
    %292 = vmatprep.subr.mxu0 0.0
    %293 = vmatpush1.msra.mxu0 0.0
    %294 = vmatprep.subr.mxu0 0.0
    %295 = vmatpush1.msra.mxu0 0.0
    %296 = vmatprep.subr.mxu0 0.0
    %297 = vmatpush1.msra.mxu0 0.0
    %298 = vmatprep.subr.mxu0 0.0
    %299 = vmatpush1.msra.mxu0 0.0
    %300 = vmatprep.subr.mxu0 0.0
    %301 = vmatpush1.msra.mxu0 0.0
    %302 = vmatprep.subr.mxu0 0.0
    %303 = vmatpush1.msra.mxu0 0.0
    %304 = vmatprep.subr.mxu0 0.0
    %305 = vmatpush1.msra.mxu0 0.0
    %306 = vmatprep.subr.mxu0 0.0
    %307 = vmatpush1.msra.mxu0 0.0
    %308 = vmatprep.subr.mxu0 0.0
    %309 = vmatpush1.msra.mxu0 0.0
    %310 = vmatprep.subr.mxu0 0.0
    %311 = vmatpush1.msra.mxu0 0.0
    %312 = vmatprep.subr.mxu0 0.0
    %313 = vmatpush1.msra.mxu0 0.0
    %314 = vmatprep.subr.mxu0 0.0
    %315 = vmatpush1.msra.mxu0 0.0
    %316 = vmatprep.subr.mxu0 0.0
    %317 = vmatpush1.msra.mxu0 0.0
    %318 = vmatprep.subr.mxu0 0.0
    %319 = vmatpush1.msra.mxu0 0.0
    %320 = vmatprep.mubr.f32.mxu0 0.0
    %321 = vmatmul.mubr.f32.gmra.mrb[0].mxu0 %v254
    %v322 = vpop.f32.mrb[0].mxu0
    %v323 = vadd.f32 0.0, %v322
    %v324 = vpop.f32.mrb[0].mxu0
    %325 = vdwg.mxu0
    %v326 = vld [vmem:[%s6] sm:$0x1]
    %v327 = vld [vmem:[%s7] sm:$0x1]
    %v328 = vsel %vm166, %v323, 0.0
    %329 = vadd.xlane.f32.xlu0 %v328
    %v330 = vpop.xlane.xlu0 %329
    %v331 = vrcp.pop 32.0
    %v332 = vmul.f32 %v330, %v331
    %v333 = vsub.f32 %v323, %v332
    %v334 = vmul.f32 %v333, %v333
    %v335 = vsel %vm166, %v334, 0.0
    %336 = vadd.xlane.f32.xlu0 %v335
    %v337 = vpop.xlane.xlu0 %336
    %v338 = vmul.f32 %v337, %v331
    %v339 = vadd.f32 %v338, 1e-05
    %v340 = vrsqrt.pop %v339
    %v341 = vmul.f32 %v333, %v340
    %v343 = vlaneseq
    %v344 = vshrl.u32 %v343, 7
    %v345 = vsub.s32 0, %v344
    %v346 = vrot.slane %v326, %v345
    %v348 = vmul.f32 %v341, %v346
    %v350 = vlaneseq
    %v351 = vshrl.u32 %v350, 7
    %v352 = vsub.s32 0, %v351
    %v353 = vrot.slane %v327, %v352
    %v355 = vadd.f32 %v348, %v353
    %v356 = vadd.f32 %v248, %v355
    %v357 = vld [vmem:[%s8] sm:$0x1]
    %v358 = vld [vmem:[%s9] sm:$0x1]
    %v359 = vsel %vm166, %v356, 0.0
    %360 = vadd.xlane.f32.xlu0 %v359
    %v361 = vpop.xlane.xlu0 %360
    %v362 = vmul.f32 %v361, %v331
    %v363 = vsub.f32 %v356, %v362
    %v364 = vmul.f32 %v363, %v363
    %v365 = vsel %vm166, %v364, 0.0
    %366 = vadd.xlane.f32.xlu0 %v365
    %v367 = vpop.xlane.xlu0 %366
    %v368 = vmul.f32 %v367, %v331
    %v369 = vadd.f32 %v368, 1e-05
    %v370 = vrsqrt.pop %v369
    %v371 = vmul.f32 %v363, %v370
    %v373 = vlaneseq
    %v374 = vshrl.u32 %v373, 7
    %v375 = vsub.s32 0, %v374
    %v376 = vrot.slane %v357, %v375
    %v378 = vmul.f32 %v371, %v376
    %v380 = vlaneseq
    %v381 = vshrl.u32 %v380, 7
    %v382 = vsub.s32 0, %v381
    %v383 = vrot.slane %v358, %v382
    %v385 = vadd.f32 %v378, %v383
    %v386 = vld [vmem:[%s10] sm:$0xff]
    %v387 = vld [vmem:[%s10 + $0x8] sm:$0xff]
    %v388 = vld [vmem:[%s10 + $0x10] sm:$0xff]
    %v389 = vld [vmem:[%s10 + $0x18] sm:$0xff]
    %v390 = vld [vmem:[%s11] sm:$0x1]
    %v392 = vlaneseq
    %v393 = vshrl.u32 %v392, 7
    %v394 = vsub.s32 0, %v393
    %v395 = vrot.slane %v390, %v394
    %v398 = vsel %vm166, %v385, 0
    %400 = vmatprep.subr.mxu0 0.0
    %401 = vmatpush1.msra.mxu0 %v386
    %402 = vmatprep.subr.mxu0 0.0
    %403 = vmatpush1.msra.mxu0 %v387
    %404 = vmatprep.subr.mxu0 0.0
    %405 = vmatpush1.msra.mxu0 %v388
    %406 = vmatprep.subr.mxu0 0.0
    %407 = vmatpush1.msra.mxu0 %v389
    %408 = vmatprep.subr.mxu0 0.0
    %409 = vmatpush1.msra.mxu0 0.0
    %410 = vmatprep.subr.mxu0 0.0
    %411 = vmatpush1.msra.mxu0 0.0
    %412 = vmatprep.subr.mxu0 0.0
    %413 = vmatpush1.msra.mxu0 0.0
    %414 = vmatprep.subr.mxu0 0.0
    %415 = vmatpush1.msra.mxu0 0.0
    %416 = vmatprep.subr.mxu0 0.0
    %417 = vmatpush1.msra.mxu0 0.0
    %418 = vmatprep.subr.mxu0 0.0
    %419 = vmatpush1.msra.mxu0 0.0
    %420 = vmatprep.subr.mxu0 0.0
    %421 = vmatpush1.msra.mxu0 0.0
    %422 = vmatprep.subr.mxu0 0.0
    %423 = vmatpush1.msra.mxu0 0.0
    %424 = vmatprep.subr.mxu0 0.0
    %425 = vmatpush1.msra.mxu0 0.0
    %426 = vmatprep.subr.mxu0 0.0
    %427 = vmatpush1.msra.mxu0 0.0
    %428 = vmatprep.subr.mxu0 0.0
    %429 = vmatpush1.msra.mxu0 0.0
    %430 = vmatprep.subr.mxu0 0.0
    %431 = vmatpush1.msra.mxu0 0.0
    %432 = vmatprep.subr.mxu0 0.0
    %433 = vmatpush1.msra.mxu0 0.0
    %434 = vmatprep.subr.mxu0 0.0
    %435 = vmatpush1.msra.mxu0 0.0
    %436 = vmatprep.subr.mxu0 0.0
    %437 = vmatpush1.msra.mxu0 0.0
    %438 = vmatprep.subr.mxu0 0.0
    %439 = vmatpush1.msra.mxu0 0.0
    %440 = vmatprep.subr.mxu0 0.0
    %441 = vmatpush1.msra.mxu0 0.0
    %442 = vmatprep.subr.mxu0 0.0
    %443 = vmatpush1.msra.mxu0 0.0
    %444 = vmatprep.subr.mxu0 0.0
    %445 = vmatpush1.msra.mxu0 0.0
    %446 = vmatprep.subr.mxu0 0.0
    %447 = vmatpush1.msra.mxu0 0.0
    %448 = vmatprep.subr.mxu0 0.0
    %449 = vmatpush1.msra.mxu0 0.0
    %450 = vmatprep.subr.mxu0 0.0
    %451 = vmatpush1.msra.mxu0 0.0
    %452 = vmatprep.subr.mxu0 0.0
    %453 = vmatpush1.msra.mxu0 0.0
    %454 = vmatprep.subr.mxu0 0.0
    %455 = vmatpush1.msra.mxu0 0.0
    %456 = vmatprep.subr.mxu0 0.0
    %457 = vmatpush1.msra.mxu0 0.0
    %458 = vmatprep.subr.mxu0 0.0
    %459 = vmatpush1.msra.mxu0 0.0
    %460 = vmatprep.subr.mxu0 0.0
    %461 = vmatpush1.msra.mxu0 0.0
    %462 = vmatprep.subr.mxu0 0.0
    %463 = vmatpush1.msra.mxu0 0.0
    %464 = vmatprep.mubr.f32.mxu0 0.0
    %465 = vmatmul.mubr.f32.gmra.mrb[0].mxu0 %v398
    %v466 = vpop.f32.mrb[0].mxu0
    %v467 = vadd.f32 %v395, %v466
    %v468 = vpop.f32.mrb[0].mxu0
    %469 = vdwg.mxu0
    %v470 = vmax.f32 %v467, 0.0
    %v471 = vld [vmem:[%s12] sm:$0xff]
    %v472 = vld [vmem:[%s12 + $0x8] sm:$0xff]
    %v473 = vld [vmem:[%s12 + $0x10] sm:$0xff]
    %v474 = vld [vmem:[%s12 + $0x18] sm:$0xff]
    %v475 = vld [vmem:[%s12 + $0x20] sm:$0xff]
    %v476 = vld [vmem:[%s12 + $0x28] sm:$0xff]
    %v477 = vld [vmem:[%s12 + $0x30] sm:$0xff]
    %v478 = vld [vmem:[%s12 + $0x38] sm:$0xff]
    %v479 = vld [vmem:[%s13] sm:$0x1]
    %v481 = vlaneseq
    %v482 = vshrl.u32 %v481, 7
    %v483 = vsub.s32 0, %v482
    %v484 = vrot.slane %v479, %v483
    %vm486 = vcmask 523264
    %v488 = vsel %vm486, %v470, 0
    %490 = vmatprep.subr.mxu0 0.0
    %491 = vmatpush1.msra.mxu0 %v471
    %492 = vmatprep.subr.mxu0 0.0
    %493 = vmatpush1.msra.mxu0 %v472
    %494 = vmatprep.subr.mxu0 0.0
    %495 = vmatpush1.msra.mxu0 %v473
    %496 = vmatprep.subr.mxu0 0.0
    %497 = vmatpush1.msra.mxu0 %v474
    %498 = vmatprep.subr.mxu0 0.0
    %499 = vmatpush1.msra.mxu0 %v475
    %500 = vmatprep.subr.mxu0 0.0
    %501 = vmatpush1.msra.mxu0 %v476
    %502 = vmatprep.subr.mxu0 0.0
    %503 = vmatpush1.msra.mxu0 %v477
    %504 = vmatprep.subr.mxu0 0.0
    %505 = vmatpush1.msra.mxu0 %v478
    %506 = vmatprep.subr.mxu0 0.0
    %507 = vmatpush1.msra.mxu0 0.0
    %508 = vmatprep.subr.mxu0 0.0
    %509 = vmatpush1.msra.mxu0 0.0
    %510 = vmatprep.subr.mxu0 0.0
    %511 = vmatpush1.msra.mxu0 0.0
    %512 = vmatprep.subr.mxu0 0.0
    %513 = vmatpush1.msra.mxu0 0.0
    %514 = vmatprep.subr.mxu0 0.0
    %515 = vmatpush1.msra.mxu0 0.0
    %516 = vmatprep.subr.mxu0 0.0
    %517 = vmatpush1.msra.mxu0 0.0
    %518 = vmatprep.subr.mxu0 0.0
    %519 = vmatpush1.msra.mxu0 0.0
    %520 = vmatprep.subr.mxu0 0.0
    %521 = vmatpush1.msra.mxu0 0.0
    %522 = vmatprep.subr.mxu0 0.0
    %523 = vmatpush1.msra.mxu0 0.0
    %524 = vmatprep.subr.mxu0 0.0
    %525 = vmatpush1.msra.mxu0 0.0
    %526 = vmatprep.subr.mxu0 0.0
    %527 = vmatpush1.msra.mxu0 0.0
    %528 = vmatprep.subr.mxu0 0.0
    %529 = vmatpush1.msra.mxu0 0.0
    %530 = vmatprep.subr.mxu0 0.0
    %531 = vmatpush1.msra.mxu0 0.0
    %532 = vmatprep.subr.mxu0 0.0
    %533 = vmatpush1.msra.mxu0 0.0
    %534 = vmatprep.subr.mxu0 0.0
    %535 = vmatpush1.msra.mxu0 0.0
    %536 = vmatprep.subr.mxu0 0.0
    %537 = vmatpush1.msra.mxu0 0.0
    %538 = vmatprep.subr.mxu0 0.0
    %539 = vmatpush1.msra.mxu0 0.0
    %540 = vmatprep.subr.mxu0 0.0
    %541 = vmatpush1.msra.mxu0 0.0
    %542 = vmatprep.subr.mxu0 0.0
    %543 = vmatpush1.msra.mxu0 0.0
    %544 = vmatprep.subr.mxu0 0.0
    %545 = vmatpush1.msra.mxu0 0.0
    %546 = vmatprep.subr.mxu0 0.0
    %547 = vmatpush1.msra.mxu0 0.0
    %548 = vmatprep.subr.mxu0 0.0
    %549 = vmatpush1.msra.mxu0 0.0
    %550 = vmatprep.subr.mxu0 0.0
    %551 = vmatpush1.msra.mxu0 0.0
    %552 = vmatprep.subr.mxu0 0.0
    %553 = vmatpush1.msra.mxu0 0.0
    %554 = vmatprep.mubr.f32.mxu0 0.0
    %555 = vmatmul.mubr.f32.gmra.mrb[0].mxu0 %v488
    %v556 = vpop.f32.mrb[0].mxu0
    %v557 = vadd.f32 %v484, %v556
    %v558 = vpop.f32.mrb[0].mxu0
    %559 = vdwg.mxu0
    %v560 = vadd.f32 %v385, %v557
    %v561 = vld [vmem:[%s14] sm:$0x1]
    %v562 = vld [vmem:[%s15] sm:$0x1]
    %v563 = vsel %vm166, %v560, 0.0
    %564 = vadd.xlane.f32.xlu0 %v563
    %v565 = vpop.xlane.xlu0 %564
    %v566 = vmul.f32 %v565, %v331
    %v567 = vsub.f32 %v560, %v566
    %v568 = vmul.f32 %v567, %v567
    %v569 = vsel %vm166, %v568, 0.0
    %570 = vadd.xlane.f32.xlu0 %v569
    %v571 = vpop.xlane.xlu0 %570
    %v572 = vmul.f32 %v571, %v331
    %v573 = vadd.f32 %v572, 1e-05
    %v574 = vrsqrt.pop %v573
    %v575 = vmul.f32 %v567, %v574
    %v577 = vlaneseq
    %v578 = vshrl.u32 %v577, 7
    %v579 = vsub.s32 0, %v578
    %v580 = vrot.slane %v561, %v579
    %v582 = vmul.f32 %v575, %v580
    %v584 = vlaneseq
    %v585 = vshrl.u32 %v584, 7
    %v586 = vsub.s32 0, %v585
    %v587 = vrot.slane %v562, %v586
    %v589 = vadd.f32 %v582, %v587
    %590 = vst.msk [vmem:[#allocation2] sm:$0xff] %vm166, %v589
    %v591 = vld [vmem:[%s16] sm:$0xff]
    %v592 = vld [vmem:[%s16 + $0x8] sm:$0xff]
    %v593 = vld [vmem:[%s16 + $0x10] sm:$0xff]
    %v594 = vld [vmem:[%s16 + $0x18] sm:$0xff]
    %v595 = vld [vmem:[%s17] sm:$0x1]
    %v597 = vlaneseq
    %v598 = vshrl.u32 %v597, 7
    %v599 = vsub.s32 0, %v598
    %v600 = vrot.slane %v595, %v599
    %v603 = vsel %vm166, %v589, 0
    %605 = vmatprep.subr.mxu0 0.0
    %606 = vmatpush1.msra.mxu0 %v591
    %607 = vmatprep.subr.mxu0 0.0
    %608 = vmatpush1.msra.mxu0 %v592
    %609 = vmatprep.subr.mxu0 0.0
    %610 = vmatpush1.msra.mxu0 %v593
    %611 = vmatprep.subr.mxu0 0.0
    %612 = vmatpush1.msra.mxu0 %v594
    %613 = vmatprep.subr.mxu0 0.0
    %614 = vmatpush1.msra.mxu0 0.0
    %615 = vmatprep.subr.mxu0 0.0
    %616 = vmatpush1.msra.mxu0 0.0
    %617 = vmatprep.subr.mxu0 0.0
    %618 = vmatpush1.msra.mxu0 0.0
    %619 = vmatprep.subr.mxu0 0.0
    %620 = vmatpush1.msra.mxu0 0.0
    %621 = vmatprep.subr.mxu0 0.0
    %622 = vmatpush1.msra.mxu0 0.0
    %623 = vmatprep.subr.mxu0 0.0
    %624 = vmatpush1.msra.mxu0 0.0
    %625 = vmatprep.subr.mxu0 0.0
    %626 = vmatpush1.msra.mxu0 0.0
    %627 = vmatprep.subr.mxu0 0.0
    %628 = vmatpush1.msra.mxu0 0.0
    %629 = vmatprep.subr.mxu0 0.0
    %630 = vmatpush1.msra.mxu0 0.0
    %631 = vmatprep.subr.mxu0 0.0
    %632 = vmatpush1.msra.mxu0 0.0
    %633 = vmatprep.subr.mxu0 0.0
    %634 = vmatpush1.msra.mxu0 0.0
    %635 = vmatprep.subr.mxu0 0.0
    %636 = vmatpush1.msra.mxu0 0.0
    %637 = vmatprep.subr.mxu0 0.0
    %638 = vmatpush1.msra.mxu0 0.0
    %639 = vmatprep.subr.mxu0 0.0
    %640 = vmatpush1.msra.mxu0 0.0
    %641 = vmatprep.subr.mxu0 0.0
    %642 = vmatpush1.msra.mxu0 0.0
    %643 = vmatprep.subr.mxu0 0.0
    %644 = vmatpush1.msra.mxu0 0.0
    %645 = vmatprep.subr.mxu0 0.0
    %646 = vmatpush1.msra.mxu0 0.0
    %647 = vmatprep.subr.mxu0 0.0
    %648 = vmatpush1.msra.mxu0 0.0
    %649 = vmatprep.subr.mxu0 0.0
    %650 = vmatpush1.msra.mxu0 0.0
    %651 = vmatprep.subr.mxu0 0.0
    %652 = vmatpush1.msra.mxu0 0.0
    %653 = vmatprep.subr.mxu0 0.0
    %654 = vmatpush1.msra.mxu0 0.0
    %655 = vmatprep.subr.mxu0 0.0
    %656 = vmatpush1.msra.mxu0 0.0
    %657 = vmatprep.subr.mxu0 0.0
    %658 = vmatpush1.msra.mxu0 0.0
    %659 = vmatprep.subr.mxu0 0.0
    %660 = vmatpush1.msra.mxu0 0.0
    %661 = vmatprep.subr.mxu0 0.0
    %662 = vmatpush1.msra.mxu0 0.0
    %663 = vmatprep.subr.mxu0 0.0
    %664 = vmatpush1.msra.mxu0 0.0
    %665 = vmatprep.subr.mxu0 0.0
    %666 = vmatpush1.msra.mxu0 0.0
    %667 = vmatprep.subr.mxu0 0.0
    %668 = vmatpush1.msra.mxu0 0.0
    %669 = vmatprep.mubr.f32.mxu0 0.0
    %670 = vmatmul.mubr.f32.gmra.mrb[0].mxu0 %v603
    %v671 = vpop.f32.mrb[0].mxu0
    %v672 = vadd.f32 %v600, %v671
    %v673 = vpop.f32.mrb[0].mxu0
    %674 = vdwg.mxu0
    %vm675 = vcmask 48128
    %676 = vst.msk [vmem:[#allocation4] sm:$0xff] %vm675, %v672
    // Predicated region
    $region74: #{tpu_custom_call.1} parent=1 // pred_check
      _
    $region75: #{tpu_custom_call.1} parent=1 // pred_check_branch
      %678 = sbr.rel (0) target = $region77
    $region76: #{tpu_custom_call.1} parent=1 // pred_region
      %s680 = ssub.s32 128, 128
      %681 = vsyncadd [#allocation3], %s680
      %s683 = sshll.u32 [#allocation2], 4
      %s684 = int_to_ptr.vmem [resolvable:$true] %s683
      %686 = dma.vmem_to_hbm [thread:$0]  %s684, 128, %s18, [#allocation3]
    $region77: #{tpu_custom_call.1} parent=1 // pred_fallthru
      _
    // Predicated region
    $region78: #{tpu_custom_call.1} parent=1 // pred_check
      _
    $region79: #{tpu_custom_call.1} parent=1 // pred_check_branch
      %688 = sbr.rel (0) target = $region81
    $region80: #{tpu_custom_call.1} parent=1 // pred_region
      %s690 = ssub.s32 128, 128
      %691 = vsyncadd [#allocation5], %s690
      %s693 = sshll.u32 [#allocation4], 4
      %s694 = int_to_ptr.vmem [resolvable:$true] %s693
      %696 = dma.vmem_to_hbm [thread:$0]  %s694, 128, %s19, [#allocation5]
    $region81: #{tpu_custom_call.1} parent=1 // pred_fallthru
      _
    // Predicated region
    $region82: #{tpu_custom_call.1} parent=1 // pred_check
      _
    $region83: #{tpu_custom_call.1} parent=1 // pred_check_branch
      %698 = sbr.rel (0) target = $region85
    $region84: #{tpu_custom_call.1} parent=1 // pred_region
      %699 = dma.done [#allocation3], 128
    $region85: #{tpu_custom_call.1} parent=1 // pred_fallthru
      _
    // Predicated region
    $region86: #{tpu_custom_call.1} parent=1 // pred_check
      _
    $region87: #{tpu_custom_call.1} parent=1 // pred_check_branch
      %701 = sbr.rel (0) target = $region89
    $region88: #{tpu_custom_call.1} parent=1 // pred_region
      %702 = dma.done [#allocation5], 128
    $region89: #{tpu_custom_call.1} parent=1 // pred_fallthru
      _
    %703 = vsyncpa [#allocation3], 1
    %704 = vsyncpa [#allocation5], 1

</llo_original>
